<compile_context>
chip_gen: v6e
topology: v6e:2x2x1
jax: 0.10.0
libtpu: 0.0.40
codegen_flags: <defaults>
</compile_context>

<pallas_src>
import functools
import math

import jax
import jax.numpy as jnp
from jax import lax
from jax.experimental import pallas as pl
from jax.experimental.pallas import tpu as pltpu


# ----------------------------- Pallas kernel --------------------------------

def _make_block_kernel(has_skip: bool, eps: float):
    """Builds the fused (skip_linear) + add + LayerNorm + mixer kernel."""

    def kernel(*refs):
        if has_skip:
            (hs_ref, skip_ref, res_ref, dp_ref,
             w_hs_ref, w_sk_ref, b_ref,
             gamma_ref, beta_ref, w_mix_ref, b_mix_ref,
             out_h_ref, out_res_ref) = refs
        else:
            (hs_ref, res_ref, dp_ref,
             gamma_ref, beta_ref, w_mix_ref, b_mix_ref,
             out_h_ref, out_res_ref) = refs

        hs = hs_ref[...].astype(jnp.float32)

        if has_skip:
            # skip_linear(concat([hidden, skip], -1)) == hs @ W_hs + skip @ W_sk + b
            hs = (jnp.dot(hs, w_hs_ref[...],
                          preferred_element_type=jnp.float32)
                  + jnp.dot(skip_ref[...].astype(jnp.float32), w_sk_ref[...],
                            preferred_element_type=jnp.float32)
                  + b_ref[...].astype(jnp.float32))

        # residual = residual + drop_path(hidden_states); dp_ref is the per-row
        # stochastic-depth keep/scale factor (1.0 in eval or when residual=None).
        res = res_ref[...].astype(jnp.float32) + dp_ref[...] * hs

        # LayerNorm over the feature dim.
        mean = jnp.mean(res, axis=-1, keepdims=True)
        cent = res - mean
        var = jnp.mean(cent * cent, axis=-1, keepdims=True)
        normed = cent * lax.rsqrt(var + eps)
        h = (normed * gamma_ref[...].astype(jnp.float32)
             + beta_ref[...].astype(jnp.float32))

        # Mixer stage (Linear stand-in; see TODO in Block.__init__).
        h = (jnp.dot(h, w_mix_ref[...], preferred_element_type=jnp.float32)
             + b_mix_ref[...].astype(jnp.float32))

        out_h_ref[...] = h.astype(out_h_ref.dtype)
        out_res_ref[...] = res.astype(out_res_ref.dtype)

    return kernel


def _pick_tile_m(m):
    for t in (512, 256, 128, 64, 32, 16, 8):
        if m % t == 0:
            return t
    return m  # block == full array extent is always legal


def _fused_block(hs2d, res2d, dp2d, params, skip2d, *, eps, res_dtype):
    """One pallas_call computing (mixer(LN(res + dp*hs)), res) over all rows."""
    M, D = hs2d.shape
    tile_m = _pick_tile_m(M)
    grid = (M // tile_m,)
    has_skip = skip2d is not None

    row_spec = pl.BlockSpec((tile_m, D), lambda i: (i, 0))
    dp_spec = pl.BlockSpec((tile_m, 1), lambda i: (i, 0))

    def full_spec(shape):
        return pl.BlockSpec(shape, lambda i: (0, 0))   # resident across grid

    in_specs = [row_spec]
    inputs = [hs2d]
    if has_skip:
        in_specs.append(row_spec)
        inputs.append(skip2d)
    in_specs += [row_spec, dp_spec]
    inputs += [res2d, dp2d]
    if has_skip:
        in_specs += [full_spec(params["w_hs"].shape),
                     full_spec(params["w_sk"].shape),
                     full_spec(params["b_skip"].shape)]
        inputs += [params["w_hs"], params["w_sk"], params["b_skip"]]
    in_specs += [full_spec(params["gamma"].shape),
                 full_spec(params["beta"].shape),
                 full_spec(params["w_mix"].shape),
                 full_spec(params["b_mix"].shape)]
    inputs += [params["gamma"], params["beta"], params["w_mix"], params["b_mix"]]

    out_shape = (jax.ShapeDtypeStruct((M, D), hs2d.dtype),
                 jax.ShapeDtypeStruct((M, D), res_dtype))
    out_specs = (row_spec, row_spec)

    kernel = _make_block_kernel(has_skip, float(eps))

    return pl.pallas_call(
        kernel,
        out_shape=out_shape,
        grid_spec=pltpu.PrefetchScalarGridSpec(
            num_scalar_prefetch=0,
            grid=grid,
            in_specs=in_specs,
            out_specs=out_specs,
        ),
        compiler_params=pltpu.CompilerParams(
            dimension_semantics=("parallel",)),   # rows independent -> 2 TCs on v7x
    )(*inputs)


# ------------------------------ Block module ---------------------------------

class Block:
    """JAX/Pallas port of the PyTorch Block (Add -> LayerNorm -> Mixer)."""

    def __init__(self, dim, *, skip=False, drop_path=0.0, residual_in_fp32=False,
                 eps=1e-5, param_key):
        self.dim = dim
        self.drop_prob = float(drop_path)
        self.residual_in_fp32 = bool(residual_in_fp32)
        self.eps = float(eps)
        self.has_skip = bool(skip)

        k_skip, k_mix = jax.random.split(param_key, 2)
        if self.has_skip:
            lim = 1.0 / math.sqrt(2 * dim)
            w_full = jax.random.uniform(k_skip, (2 * dim, dim),
                                        minval=-lim, maxval=lim,
                                        dtype=jnp.float32)
            self.w_hs = w_full[:dim]      # acts on hidden_states
            self.w_sk = w_full[dim:]      # acts on skip
            self.b_skip = jnp.zeros((1, dim), jnp.float32)

        # LayerNorm parameters (norm_cls=nn.LayerNorm default init).
        self.gamma = jnp.ones((1, dim), jnp.float32)
        self.beta = jnp.zeros((1, dim), jnp.float32)

        # TODO(synk): mixer_cls (e.g. Mamba) is external to this module; a single
        # Linear mixer stands in so the fused kernel still has a mixer stage.
        lim_m = 1.0 / math.sqrt(dim)
        self.w_mix = jax.random.uniform(k_mix, (dim, dim),
                                        minval=-lim_m, maxval=lim_m,
                                        dtype=jnp.float32)
        self.b_mix = jnp.zeros((1, dim), jnp.float32)

    def __call__(self, hidden_states, residual=None, skip=None, *,
                 training=False, drop_key=None):
        B, L, D = hidden_states.shape
        M = B * L
        hs2d = hidden_states.reshape(M, D)
        skip2d = skip.reshape(M, D) if self.has_skip else None

        if residual is None:
            # residual = hidden_states  (no drop_path on the very first block)
            res2d = jnp.zeros((M, D), hidden_states.dtype)
            dp2d = jnp.ones((M, 1), jnp.float32)
        else:
            res2d = residual.reshape(M, D)
            if training and self.drop_prob > 0.0:
                keep_prob = 1.0 - self.drop_prob
                keep = jax.random.bernoulli(drop_key, keep_prob, (B, 1))
                dp = keep.astype(jnp.float32) / keep_prob
            else:
                dp = jnp.ones((B, 1), jnp.float32)
            dp2d = jnp.broadcast_to(dp[:, None, :], (B, L, 1)).reshape(M, 1)

        params = dict(gamma=self.gamma, beta=self.beta,
                      w_mix=self.w_mix, b_mix=self.b_mix)
        if self.has_skip:
            params.update(w_hs=self.w_hs, w_sk=self.w_sk, b_skip=self.b_skip)

        res_dtype = jnp.float32 if self.residual_in_fp32 else hidden_states.dtype
        out_h, out_res = _fused_block(hs2d, res2d, dp2d, params, skip2d,
                                      eps=self.eps, res_dtype=res_dtype)
        return out_h.reshape(B, L, D), out_res.reshape(B, L, D)


# ------------------------------ Pure-JAX reference ---------------------------

def _ref_block(block, hidden_states, residual=None, skip=None):
    hs = hidden_states.astype(jnp.float32)
    if block.has_skip:
        w_full = jnp.concatenate([block.w_hs, block.w_sk], axis=0)
        hs = jnp.concatenate([hs, skip.astype(jnp.float32)], axis=-1) @ w_full \
            + block.b_skip[0]
    if residual is None:
        res = hs
    else:
        res = residual.astype(jnp.float32) + hs        # drop_path identity (eval)
    mean = res.mean(-1, keepdims=True)
    var = ((res - mean) ** 2).mean(-1, keepdims=True)
    normed = (res - mean) / jnp.sqrt(var + block.eps)
    h = normed * block.gamma[0] + block.beta[0]
    h = h @ block.w_mix + block.b_mix[0]
    res_dtype = jnp.float32 if block.residual_in_fp32 else hidden_states.dtype
    return h.astype(hidden_states.dtype), res.astype(res_dtype)


# --------------------------------- main ---------------------------------------

if __name__ == "__main__":
    B, L, D = 2, 8, 128   # D lane-dense (multiple of 128); B*L=16 rows (mult of 8)

    root = jax.random.PRNGKey(0)
    k_param, k_hs, k_res, k_skip = jax.random.split(root, 4)

    block = Block(D, skip=True, drop_path=0.0, residual_in_fp32=True,
                  param_key=k_param)

    hs = jax.random.normal(k_hs, (B, L, D), jnp.float32)
    res = jax.random.normal(k_res, (B, L, D), jnp.float32)
    skip_x = jax.random.normal(k_skip, (B, L, D), jnp.float32)

    # First-block path (residual=None).
    h0, r0 = block(hs, residual=None, skip=skip_x)
    h0 = jax.block_until_ready(h0)
    r0 = jax.block_until_ready(r0)

    # Subsequent-block path (residual provided), eval mode.
    h1, r1 = block(hs, residual=res, skip=skip_x)
    h1 = jax.block_until_ready(h1)
    r1 = jax.block_until_ready(r1)

    ref_h0, ref_r0 = _ref_block(block, hs, None, skip_x)
    ref_h1, ref_r1 = _ref_block(block, hs, res, skip_x)

    assert h0.shape == (B, L, D) and r0.shape == (B, L, D)
    assert r0.dtype == jnp.float32 and r1.dtype == jnp.float32
    assert jnp.allclose(h0, ref_h0, atol=1e-4, rtol=1e-4)
    assert jnp.allclose(r0, ref_r0, atol=1e-4, rtol=1e-4)
    assert jnp.allclose(h1, ref_h1, atol=1e-4, rtol=1e-4)
    assert jnp.allclose(r1, ref_r1, atol=1e-4, rtol=1e-4)

    print("KERNEL_OK")
</pallas_src>

<mosaic_0001>
module attributes {stable_mosaic.version = 11 : i64} {
  func.func @kernel(%arg0: i32, %arg1: memref<16x128xf32, #tpu.memory_space<vmem>>, %arg2: memref<16x128xf32, #tpu.memory_space<vmem>>, %arg3: memref<16x128xf32, #tpu.memory_space<vmem>>, %arg4: memref<16x1xf32, #tpu.memory_space<vmem>>, %arg5: memref<128x128xf32, #tpu.memory_space<vmem>>, %arg6: memref<128x128xf32, #tpu.memory_space<vmem>>, %arg7: memref<1x128xf32, #tpu.memory_space<vmem>>, %arg8: memref<1x128xf32, #tpu.memory_space<vmem>>, %arg9: memref<1x128xf32, #tpu.memory_space<vmem>>, %arg10: memref<128x128xf32, #tpu.memory_space<vmem>>, %arg11: memref<1x128xf32, #tpu.memory_space<vmem>>, %arg12: memref<16x128xf32, #tpu.memory_space<vmem>>, %arg13: memref<16x128xf32, #tpu.memory_space<vmem>>) attributes {dimension_semantics = [#tpu.dimension_semantics<parallel>], iteration_bounds = array<i64: 1>, scalar_prefetch = 0 : i64, scratch_operands = 0 : i64, tpu.core_type = #tpu.core_type<tc>, window_params = [{transform_indices = @transform_0, window_bounds = array<i64: 16, 128>}, {transform_indices = @transform_1, window_bounds = array<i64: 16, 128>}, {transform_indices = @transform_2, window_bounds = array<i64: 16, 128>}, {transform_indices = @transform_3, window_bounds = array<i64: 16, 1>}, {pipeline_mode = #tpu.pipeline_mode<synchronous>, transform_indices = @transform_4, window_bounds = array<i64: 128, 128>}, {pipeline_mode = #tpu.pipeline_mode<synchronous>, transform_indices = @transform_5, window_bounds = array<i64: 128, 128>}, {pipeline_mode = #tpu.pipeline_mode<synchronous>, transform_indices = @transform_6, window_bounds = array<i64: 1, 128>}, {pipeline_mode = #tpu.pipeline_mode<synchronous>, transform_indices = @transform_7, window_bounds = array<i64: 1, 128>}, {pipeline_mode = #tpu.pipeline_mode<synchronous>, transform_indices = @transform_8, window_bounds = array<i64: 1, 128>}, {pipeline_mode = #tpu.pipeline_mode<synchronous>, transform_indices = @transform_9, window_bounds = array<i64: 128, 128>}, {pipeline_mode = #tpu.pipeline_mode<synchronous>, transform_indices = @transform_10, window_bounds = array<i64: 1, 128>}, {transform_indices = @transform_11, window_bounds = array<i64: 16, 128>}, {transform_indices = @transform_12, window_bounds = array<i64: 16, 128>}]} {
    %c0 = arith.constant 0 : index
    %c0_0 = arith.constant 0 : index
    %0 = vector.load %arg1[%c0, %c0_0] : memref<16x128xf32, #tpu.memory_space<vmem>>, vector<16x128xf32>
    %c0_1 = arith.constant 0 : index
    %c0_2 = arith.constant 0 : index
    %1 = vector.load %arg5[%c0_1, %c0_2] : memref<128x128xf32, #tpu.memory_space<vmem>>, vector<128x128xf32>
    %cst = arith.constant dense<0.000000e+00> : vector<16x128xf32>
    %2 = tpu.matmul %0, %1, %cst {dimension_numbers = #tpu.dot_dimension_numbers<[1], [0], [0], [1], [0, 0, 1, 1], [], []>} : vector<16x128xf32>, vector<128x128xf32>, vector<16x128xf32> -> vector<16x128xf32>
    %c0_3 = arith.constant 0 : index
    %c0_4 = arith.constant 0 : index
    %3 = vector.load %arg2[%c0_3, %c0_4] : memref<16x128xf32, #tpu.memory_space<vmem>>, vector<16x128xf32>
    %c0_5 = arith.constant 0 : index
    %c0_6 = arith.constant 0 : index
    %4 = vector.load %arg6[%c0_5, %c0_6] : memref<128x128xf32, #tpu.memory_space<vmem>>, vector<128x128xf32>
    %cst_7 = arith.constant dense<0.000000e+00> : vector<16x128xf32>
    %5 = tpu.matmul %3, %4, %cst_7 {dimension_numbers = #tpu.dot_dimension_numbers<[1], [0], [0], [1], [0, 0, 1, 1], [], []>} : vector<16x128xf32>, vector<128x128xf32>, vector<16x128xf32> -> vector<16x128xf32>
    %6 = arith.addf %2, %5 : vector<16x128xf32>
    %c0_8 = arith.constant 0 : index
    %c0_9 = arith.constant 0 : index
    %7 = vector.load %arg7[%c0_8, %c0_9] : memref<1x128xf32, #tpu.memory_space<vmem>>, vector<1x128xf32>
    %8 = vector.broadcast %7 : vector<1x128xf32> to vector<16x128xf32>
    %9 = arith.addf %6, %8 : vector<16x128xf32>
    %c0_10 = arith.constant 0 : index
    %c0_11 = arith.constant 0 : index
    %10 = vector.load %arg3[%c0_10, %c0_11] : memref<16x128xf32, #tpu.memory_space<vmem>>, vector<16x128xf32>
    %c0_12 = arith.constant 0 : index
    %c0_13 = arith.constant 0 : index
    %11 = vector.load %arg4[%c0_12, %c0_13] : memref<16x1xf32, #tpu.memory_space<vmem>>, vector<16x1xf32>
    %12 = vector.broadcast %11 : vector<16x1xf32> to vector<16x128xf32>
    %13 = arith.mulf %12, %9 : vector<16x128xf32>
    %14 = arith.addf %10, %13 : vector<16x128xf32>
    %cst_14 = arith.constant dense<0.000000e+00> : vector<16xf32>
    %15 = vector.multi_reduction <add>, %14, %cst_14 [1] : vector<16x128xf32> to vector<16xf32>
    %16 = vector.shape_cast %15 : vector<16xf32> to vector<16x1xf32>
    %cst_15 = arith.constant 1.280000e+02 : f32
    %17 = vector.broadcast %cst_15 : f32 to vector<16x1xf32>
    %18 = arith.divf %16, %17 : vector<16x1xf32>
    %19 = vector.broadcast %18 : vector<16x1xf32> to vector<16x128xf32>
    %20 = arith.subf %14, %19 : vector<16x128xf32>
    %21 = arith.mulf %20, %20 : vector<16x128xf32>
    %cst_16 = arith.constant dense<0.000000e+00> : vector<16xf32>
    %22 = vector.multi_reduction <add>, %21, %cst_16 [1] : vector<16x128xf32> to vector<16xf32>
    %23 = vector.shape_cast %22 : vector<16xf32> to vector<16x1xf32>
    %cst_17 = arith.constant 1.280000e+02 : f32
    %24 = vector.broadcast %cst_17 : f32 to vector<16x1xf32>
    %25 = arith.divf %23, %24 : vector<16x1xf32>
    %cst_18 = arith.constant 9.99999974E-6 : f32
    %26 = vector.broadcast %cst_18 : f32 to vector<16x1xf32>
    %27 = arith.addf %25, %26 : vector<16x1xf32>
    %28 = math.rsqrt %27 : vector<16x1xf32>
    %29 = vector.broadcast %28 : vector<16x1xf32> to vector<16x128xf32>
    %30 = arith.mulf %20, %29 : vector<16x128xf32>
    %c0_19 = arith.constant 0 : index
    %c0_20 = arith.constant 0 : index
    %31 = vector.load %arg8[%c0_19, %c0_20] : memref<1x128xf32, #tpu.memory_space<vmem>>, vector<1x128xf32>
    %32 = vector.broadcast %31 : vector<1x128xf32> to vector<16x128xf32>
    %33 = arith.mulf %30, %32 : vector<16x128xf32>
    %c0_21 = arith.constant 0 : index
    %c0_22 = arith.constant 0 : index
    %34 = vector.load %arg9[%c0_21, %c0_22] : memref<1x128xf32, #tpu.memory_space<vmem>>, vector<1x128xf32>
    %35 = vector.broadcast %34 : vector<1x128xf32> to vector<16x128xf32>
    %36 = arith.addf %33, %35 : vector<16x128xf32>
    %c0_23 = arith.constant 0 : index
    %c0_24 = arith.constant 0 : index
    %37 = vector.load %arg10[%c0_23, %c0_24] : memref<128x128xf32, #tpu.memory_space<vmem>>, vector<128x128xf32>
    %cst_25 = arith.constant dense<0.000000e+00> : vector<16x128xf32>
    %38 = tpu.matmul %36, %37, %cst_25 {dimension_numbers = #tpu.dot_dimension_numbers<[1], [0], [0], [1], [0, 0, 1, 1], [], []>} : vector<16x128xf32>, vector<128x128xf32>, vector<16x128xf32> -> vector<16x128xf32>
    %c0_26 = arith.constant 0 : index
    %c0_27 = arith.constant 0 : index
    %39 = vector.load %arg11[%c0_26, %c0_27] : memref<1x128xf32, #tpu.memory_space<vmem>>, vector<1x128xf32>
    %40 = vector.broadcast %39 : vector<1x128xf32> to vector<16x128xf32>
    %41 = arith.addf %38, %40 : vector<16x128xf32>
    %c0_28 = arith.constant 0 : index
    %c0_29 = arith.constant 0 : index
    %42 = vector.load %arg12[%c0_28, %c0_29] : memref<16x128xf32, #tpu.memory_space<vmem>>, vector<16x128xf32>
    tpu.vector_store %arg12[%c0_28, %c0_29], %41 {strides = array<i32>} : memref<16x128xf32, #tpu.memory_space<vmem>>, vector<16x128xf32>,
    %c0_30 = arith.constant 0 : index
    %c0_31 = arith.constant 0 : index
    %43 = vector.load %arg13[%c0_30, %c0_31] : memref<16x128xf32, #tpu.memory_space<vmem>>, vector<16x128xf32>
    tpu.vector_store %arg13[%c0_30, %c0_31], %14 {strides = array<i32>} : memref<16x128xf32, #tpu.memory_space<vmem>>, vector<16x128xf32>,
    return
  }
  func.func @transform_0(%arg0: i32) -> (i32, i32) {
    %c0_i32 = arith.constant 0 : i32
    %c0_i32_0 = arith.constant 0 : i32
    return %arg0, %c0_i32 : i32, i32
  }
  func.func @transform_1(%arg0: i32) -> (i32, i32) {
    %c0_i32 = arith.constant 0 : i32
    %c0_i32_0 = arith.constant 0 : i32
    return %arg0, %c0_i32 : i32, i32
  }
  func.func @transform_2(%arg0: i32) -> (i32, i32) {
    %c0_i32 = arith.constant 0 : i32
    %c0_i32_0 = arith.constant 0 : i32
    return %arg0, %c0_i32 : i32, i32
  }
  func.func @transform_3(%arg0: i32) -> (i32, i32) {
    %c0_i32 = arith.constant 0 : i32
    %c0_i32_0 = arith.constant 0 : i32
    return %arg0, %c0_i32 : i32, i32
  }
  func.func @transform_4(%arg0: i32) -> (i32, i32) {
    %c0_i32 = arith.constant 0 : i32
    %c0_i32_0 = arith.constant 0 : i32
    %c0_i32_1 = arith.constant 0 : i32
    return %c0_i32, %c0_i32_0 : i32, i32
  }
  func.func @transform_5(%arg0: i32) -> (i32, i32) {
    %c0_i32 = arith.constant 0 : i32
    %c0_i32_0 = arith.constant 0 : i32
    %c0_i32_1 = arith.constant 0 : i32
    return %c0_i32, %c0_i32_0 : i32, i32
  }
  func.func @transform_6(%arg0: i32) -> (i32, i32) {
    %c0_i32 = arith.constant 0 : i32
    %c0_i32_0 = arith.constant 0 : i32
    %c0_i32_1 = arith.constant 0 : i32
    return %c0_i32, %c0_i32_0 : i32, i32
  }
  func.func @transform_7(%arg0: i32) -> (i32, i32) {
    %c0_i32 = arith.constant 0 : i32
    %c0_i32_0 = arith.constant 0 : i32
    %c0_i32_1 = arith.constant 0 : i32
    return %c0_i32, %c0_i32_0 : i32, i32
  }
  func.func @transform_8(%arg0: i32) -> (i32, i32) {
    %c0_i32 = arith.constant 0 : i32
    %c0_i32_0 = arith.constant 0 : i32
    %c0_i32_1 = arith.constant 0 : i32
    return %c0_i32, %c0_i32_0 : i32, i32
  }
  func.func @transform_9(%arg0: i32) -> (i32, i32) {
    %c0_i32 = arith.constant 0 : i32
    %c0_i32_0 = arith.constant 0 : i32
    %c0_i32_1 = arith.constant 0 : i32
    return %c0_i32, %c0_i32_0 : i32, i32
  }
  func.func @transform_10(%arg0: i32) -> (i32, i32) {
    %c0_i32 = arith.constant 0 : i32
    %c0_i32_0 = arith.constant 0 : i32
    %c0_i32_1 = arith.constant 0 : i32
    return %c0_i32, %c0_i32_0 : i32, i32
  }
  func.func @transform_11(%arg0: i32) -> (i32, i32) {
    %c0_i32 = arith.constant 0 : i32
    %c0_i32_0 = arith.constant 0 : i32
    return %arg0, %c0_i32 : i32, i32
  }
  func.func @transform_12(%arg0: i32) -> (i32, i32) {
    %c0_i32 = arith.constant 0 : i32
    %c0_i32_0 = arith.constant 0 : i32
    return %arg0, %c0_i32 : i32, i32
  }
}

</mosaic_0001>

<llo_original>
// kernel: tpu_custom_call.1
$region0: #{tpu_custom_call.1}
  #allocation0 [shape = 'u32[]', space=smem, size = 0x4, offset = 0x4, fixed_abs, tag = 'smem constant byte address 0x4 - core index']
  #allocation1 [shape = 'u32[144,128]{1,0:T(1,128)}', space=vmem, size = 0x12000, scoped, tag = 'internal scratch']
  %s0 = inlined_call_operand.vmem [shape: f32[16,128], index: 0, kind: input, shape index: {}]
  %s1 = inlined_call_operand.hbm [shape: f32[16,128], index: 1, kind: input, shape index: {}]
  %s2 = inlined_call_operand.hbm [shape: f32[16,128], index: 2, kind: input, shape index: {}]
  %s3 = inlined_call_operand.vmem [shape: f32[16,1], index: 3, kind: input, shape index: {}]
  %s4 = inlined_call_operand.hbm [shape: f32[128,128], index: 4, kind: input, shape index: {}]
  %s5 = inlined_call_operand.hbm [shape: f32[128,128], index: 5, kind: input, shape index: {}]
  %s6 = inlined_call_operand.vmem [shape: f32[1,128], index: 6, kind: input, shape index: {}]
  %s7 = inlined_call_operand.vmem [shape: f32[1,128], index: 7, kind: input, shape index: {}]
  %s8 = inlined_call_operand.vmem [shape: f32[1,128], index: 8, kind: input, shape index: {}]
  %s9 = inlined_call_operand.hbm [shape: f32[128,128], index: 9, kind: input, shape index: {}]
  %s10 = inlined_call_operand.vmem [shape: f32[1,128], index: 10, kind: input, shape index: {}]
  %s11 = inlined_call_operand.hbm [shape: f32[16,128], index: 11, kind: output, shape index: {0}]
  %s12 = inlined_call_operand.hbm [shape: f32[16,128], index: 12, kind: output, shape index: {1}]
  %13 = xla_tuple %s11, %s12
  %s14 = sld [smem:[#allocation0]]
  $region82: #{tpu_custom_call.1} parent=0
    _
  %s16 = ssub.s32 1, %s14
  %s17 = scalar_select 0, %s16, %s14
  $region1: #{tpu_custom_call.1} parent=0
    #allocation2 [shape = 'u8[8192]{0}', space=vmem, size = 0x2000, scoped, tag = 'input window, operand 1, single buffered']
    #allocation3 [shape = 's32[1]{0}', space=sflag, size = 0x4, scoped, tag = 'scoped memory for tpu_custom_call.1']
    #allocation4 [shape = 's32[1]{0}', space=sflag, size = 0x4, scoped, tag = 'scoped memory for tpu_custom_call.1']
    #allocation5 [shape = 'u8[8192]{0}', space=vmem, size = 0x2000, scoped, tag = 'input window, operand 2, single buffered']
    #allocation6 [shape = 's32[1]{0}', space=sflag, size = 0x4, scoped, tag = 'scoped memory for tpu_custom_call.1']
    #allocation7 [shape = 'u8[65536]{0}', space=vmem, size = 0x10000, scoped, tag = 'input window, operand 4, single buffered']
    #allocation8 [shape = 'u8[65536]{0}', space=vmem, size = 0x10000, scoped, tag = 'input window, operand 5, single buffered']
    #allocation9 [shape = 's32[1]{0}', space=sflag, size = 0x4, scoped, tag = 'scoped memory for tpu_custom_call.1']
    #allocation10 [shape = 'u8[65536]{0}', space=vmem, size = 0x10000, scoped, tag = 'input window, operand 9, single buffered']
    #allocation11 [shape = 'u8[8192]{0}', space=vmem, size = 0x2000, scoped, tag = 'output window, operand 0, single buffered']
    #allocation12 [shape = 'u8[8192]{0}', space=vmem, size = 0x2000, scoped, tag = 'output window, operand 1, single buffered']
    #allocation13 [shape = 's32[1]{0}', space=sflag, size = 0x4, scoped, tag = 'scoped memory for tpu_custom_call.1']
    %18 = vsyncpa [#allocation3], 0
    %19 = vsyncpa [#allocation6], 0
    %20 = vsyncpa [#allocation9], 0
    %21 = vsyncpa [#allocation4], 0
    %22 = vsyncpa [#allocation13], 0
    // Predicated region
    $region2: #{tpu_custom_call.1} parent=1 // pred_check
      _
    $region3: #{tpu_custom_call.1} parent=1 // pred_check_branch
      %24 = sbr.rel (0) target = $region5
    $region4: #{tpu_custom_call.1} parent=1 // pred_region
      _
    $region5: #{tpu_custom_call.1} parent=1 // pred_fallthru
      _
    // Predicated region
    $region6: #{tpu_custom_call.1} parent=1 // pred_check
      _
    $region7: #{tpu_custom_call.1} parent=1 // pred_check_branch
      %26 = sbr.rel (0) target = $region9
    $region8: #{tpu_custom_call.1} parent=1 // pred_region
      %s28 = ssub.s32 256, 256
      %29 = vsyncadd [#allocation3], %s28
      %s30 = sshll.u32 [#allocation2], 4
      %s31 = int_to_ptr.vmem [resolvable:$true] %s30
      %36 = dma.hbm_to_vmem [thread:$0]  %s1, 256, %s31, [#allocation3], 128, 128, 8
    $region9: #{tpu_custom_call.1} parent=1 // pred_fallthru
      _
    // Predicated region
    $region10: #{tpu_custom_call.1} parent=1 // pred_check
      _
    $region11: #{tpu_custom_call.1} parent=1 // pred_check_branch
      %38 = sbr.rel (0) target = $region13
    $region12: #{tpu_custom_call.1} parent=1 // pred_region
      %s40 = ssub.s32 256, 256
      %41 = vsyncadd [#allocation6], %s40
      %s42 = sshll.u32 [#allocation5], 4
      %s43 = int_to_ptr.vmem [resolvable:$true] %s42
      %48 = dma.hbm_to_vmem [thread:$0]  %s2, 256, %s43, [#allocation6], 128, 128, 8
    $region13: #{tpu_custom_call.1} parent=1 // pred_fallthru
      _
    // Predicated region
    $region14: #{tpu_custom_call.1} parent=1 // pred_check
      _
    $region15: #{tpu_custom_call.1} parent=1 // pred_check_branch
      %50 = sbr.rel (0) target = $region17
    $region16: #{tpu_custom_call.1} parent=1 // pred_region
      _
    $region17: #{tpu_custom_call.1} parent=1 // pred_fallthru
      _
    // Predicated region
    $region18: #{tpu_custom_call.1} parent=1 // pred_check
      _
    $region19: #{tpu_custom_call.1} parent=1 // pred_check_branch
      %52 = sbr.rel (0) target = $region21
    $region20: #{tpu_custom_call.1} parent=1 // pred_region
      %s54 = ssub.s32 2048, 2048
      %55 = vsyncadd [#allocation6], %s54
      %s56 = sshll.u32 [#allocation7], 4
      %s57 = int_to_ptr.vmem [resolvable:$true] %s56
      %62 = dma.hbm_to_vmem [thread:$0]  %s4, 2048, %s57, [#allocation6], 128, 128, 8
    $region21: #{tpu_custom_call.1} parent=1 // pred_fallthru
      _
    // Predicated region
    $region22: #{tpu_custom_call.1} parent=1 // pred_check
      _
    $region23: #{tpu_custom_call.1} parent=1 // pred_check_branch
      %64 = sbr.rel (0) target = $region25
    $region24: #{tpu_custom_call.1} parent=1 // pred_region
      %s66 = ssub.s32 2048, 2048
      %67 = vsyncadd [#allocation9], %s66
      %s68 = sshll.u32 [#allocation8], 4
      %s69 = int_to_ptr.vmem [resolvable:$true] %s68
      %74 = dma.hbm_to_vmem [thread:$0]  %s5, 2048, %s69, [#allocation9], 128, 128, 8
    $region25: #{tpu_custom_call.1} parent=1 // pred_fallthru
      _
    // Predicated region
    $region26: #{tpu_custom_call.1} parent=1 // pred_check
      _
    $region27: #{tpu_custom_call.1} parent=1 // pred_check_branch
      %76 = sbr.rel (0) target = $region29
    $region28: #{tpu_custom_call.1} parent=1 // pred_region
      _
    $region29: #{tpu_custom_call.1} parent=1 // pred_fallthru
      _
    // Predicated region
    $region30: #{tpu_custom_call.1} parent=1 // pred_check
      _
    $region31: #{tpu_custom_call.1} parent=1 // pred_check_branch
      %78 = sbr.rel (0) target = $region33
    $region32: #{tpu_custom_call.1} parent=1 // pred_region
      _
    $region33: #{tpu_custom_call.1} parent=1 // pred_fallthru
      _
    // Predicated region
    $region34: #{tpu_custom_call.1} parent=1 // pred_check
      _
    $region35: #{tpu_custom_call.1} parent=1 // pred_check_branch
      %80 = sbr.rel (0) target = $region37
    $region36: #{tpu_custom_call.1} parent=1 // pred_region
      _
    $region37: #{tpu_custom_call.1} parent=1 // pred_fallthru
      _
    // Predicated region
    $region38: #{tpu_custom_call.1} parent=1 // pred_check
      _
    $region39: #{tpu_custom_call.1} parent=1 // pred_check_branch
      %82 = sbr.rel (0) target = $region41
    $region40: #{tpu_custom_call.1} parent=1 // pred_region
      %s84 = ssub.s32 2048, 2048
      %85 = vsyncadd [#allocation9], %s84
      %s86 = sshll.u32 [#allocation10], 4
      %s87 = int_to_ptr.vmem [resolvable:$true] %s86
      %92 = dma.hbm_to_vmem [thread:$0]  %s9, 2048, %s87, [#allocation9], 128, 128, 8
    $region41: #{tpu_custom_call.1} parent=1 // pred_fallthru
      _
    // Predicated region
    $region42: #{tpu_custom_call.1} parent=1 // pred_check
      _
    $region43: #{tpu_custom_call.1} parent=1 // pred_check_branch
      %94 = sbr.rel (0) target = $region45
    $region44: #{tpu_custom_call.1} parent=1 // pred_region
      _
    $region45: #{tpu_custom_call.1} parent=1 // pred_fallthru
      _
    // Predicated region
    $region46: #{tpu_custom_call.1} parent=1 // pred_check
      _
    $region47: #{tpu_custom_call.1} parent=1 // pred_check_branch
      %96 = sbr.rel (0) target = $region49
    $region48: #{tpu_custom_call.1} parent=1 // pred_region
      %97 = dma.done [#allocation3], 256
    $region49: #{tpu_custom_call.1} parent=1 // pred_fallthru
      _
    // Predicated region
    $region50: #{tpu_custom_call.1} parent=1 // pred_check
      _
    $region51: #{tpu_custom_call.1} parent=1 // pred_check_branch
      %99 = sbr.rel (0) target = $region53
    $region52: #{tpu_custom_call.1} parent=1 // pred_region
      %100 = dma.done [#allocation6], 256
    $region53: #{tpu_custom_call.1} parent=1 // pred_fallthru
      _
    // Predicated region
    $region54: #{tpu_custom_call.1} parent=1 // pred_check
      _
    $region55: #{tpu_custom_call.1} parent=1 // pred_check_branch
      %102 = sbr.rel (0) target = $region57
    $region56: #{tpu_custom_call.1} parent=1 // pred_region
      %103 = dma.done [#allocation6], 2048
    $region57: #{tpu_custom_call.1} parent=1 // pred_fallthru
      _
    // Predicated region
    $region58: #{tpu_custom_call.1} parent=1 // pred_check
      _
    $region59: #{tpu_custom_call.1} parent=1 // pred_check_branch
      %105 = sbr.rel (0) target = $region61
    $region60: #{tpu_custom_call.1} parent=1 // pred_region
      %106 = dma.done [#allocation9], 2048
    $region61: #{tpu_custom_call.1} parent=1 // pred_fallthru
      _
    // Predicated region
    $region62: #{tpu_custom_call.1} parent=1 // pred_check
      _
    $region63: #{tpu_custom_call.1} parent=1 // pred_check_branch
      %108 = sbr.rel (0) target = $region65
    $region64: #{tpu_custom_call.1} parent=1 // pred_region
      %109 = dma.done [#allocation9], 2048
    $region65: #{tpu_custom_call.1} parent=1 // pred_fallthru
      _
    %v110 = vld [vmem:[%s0] sm:$0xff]
    %v111 = vld [vmem:[%s0 + $0x8] sm:$0xff]
    %v112 = vld [vmem:[#allocation7] sm:$0xff]
    %v113 = vld [vmem:[#allocation7 + $0x8] sm:$0xff]
    %v114 = vld [vmem:[#allocation7 + $0x10] sm:$0xff]
    %v115 = vld [vmem:[#allocation7 + $0x18] sm:$0xff]
    %v116 = vld [vmem:[#allocation7 + $0x20] sm:$0xff]
    %v117 = vld [vmem:[#allocation7 + $0x28] sm:$0xff]
    %v118 = vld [vmem:[#allocation7 + $0x30] sm:$0xff]
    %v119 = vld [vmem:[#allocation7 + $0x38] sm:$0xff]
    %v120 = vld [vmem:[#allocation7 + $0x40] sm:$0xff]
    %v121 = vld [vmem:[#allocation7 + $0x48] sm:$0xff]
    %v122 = vld [vmem:[#allocation7 + $0x50] sm:$0xff]
    %v123 = vld [vmem:[#allocation7 + $0x58] sm:$0xff]
    %v124 = vld [vmem:[#allocation7 + $0x60] sm:$0xff]
    %v125 = vld [vmem:[#allocation7 + $0x68] sm:$0xff]
    %v126 = vld [vmem:[#allocation7 + $0x70] sm:$0xff]
    %v127 = vld [vmem:[#allocation7 + $0x78] sm:$0xff]
    %v128 = vld [vmem:[#allocation2] sm:$0xff]
    %v129 = vld [vmem:[#allocation2 + $0x8] sm:$0xff]
    %v130 = vld [vmem:[#allocation8] sm:$0xff]
    %v131 = vld [vmem:[#allocation8 + $0x8] sm:$0xff]
    %v132 = vld [vmem:[#allocation8 + $0x10] sm:$0xff]
    %v133 = vld [vmem:[#allocation8 + $0x18] sm:$0xff]
    %v134 = vld [vmem:[#allocation8 + $0x20] sm:$0xff]
    %v135 = vld [vmem:[#allocation8 + $0x28] sm:$0xff]
    %v136 = vld [vmem:[#allocation8 + $0x30] sm:$0xff]
    %v137 = vld [vmem:[#allocation8 + $0x38] sm:$0xff]
    %v138 = vld [vmem:[#allocation8 + $0x40] sm:$0xff]
    %v139 = vld [vmem:[#allocation8 + $0x48] sm:$0xff]
    %v140 = vld [vmem:[#allocation8 + $0x50] sm:$0xff]
    %v141 = vld [vmem:[#allocation8 + $0x58] sm:$0xff]
    %v142 = vld [vmem:[#allocation8 + $0x60] sm:$0xff]
    %v143 = vld [vmem:[#allocation8 + $0x68] sm:$0xff]
    %v144 = vld [vmem:[#allocation8 + $0x70] sm:$0xff]
    %v145 = vld [vmem:[#allocation8 + $0x78] sm:$0xff]
    %146 = vmatprep.subr.mxu0 0.0
    %147 = vmatpush1.msra.mxu0 %v145
    %148 = vmatprep.subr.mxu0 0.0
    %149 = vmatpush1.msra.mxu0 %v144
    %150 = vmatprep.subr.mxu0 0.0
    %151 = vmatpush1.msra.mxu0 %v143
    %152 = vmatprep.subr.mxu0 0.0
    %153 = vmatpush1.msra.mxu0 %v142
    %154 = vmatprep.subr.mxu0 0.0
    %155 = vmatpush1.msra.mxu0 %v141
    %156 = vmatprep.subr.mxu0 0.0
    %157 = vmatpush1.msra.mxu0 %v140
    %158 = vmatprep.subr.mxu0 0.0
    %159 = vmatpush1.msra.mxu0 %v139
    %160 = vmatprep.subr.mxu0 0.0
    %161 = vmatpush1.msra.mxu0 %v138
    %162 = vmatprep.subr.mxu0 0.0
    %163 = vmatpush1.msra.mxu0 %v137
    %164 = vmatprep.subr.mxu0 0.0
    %165 = vmatpush1.msra.mxu0 %v136
    %166 = vmatprep.subr.mxu0 0.0
    %167 = vmatpush1.msra.mxu0 %v135
    %168 = vmatprep.subr.mxu0 0.0
    %169 = vmatpush1.msra.mxu0 %v134
    %170 = vmatprep.subr.mxu0 0.0
    %171 = vmatpush1.msra.mxu0 %v133
    %172 = vmatprep.subr.mxu0 0.0
    %173 = vmatpush1.msra.mxu0 %v132
    %174 = vmatprep.subr.mxu0 0.0
    %175 = vmatpush1.msra.mxu0 %v131
    %176 = vmatprep.subr.mxu0 0.0
    %177 = vmatpush1.msra.mxu0 %v130
    %178 = vmatprep.subr.mxu0 0.0
    %179 = vmatpush2.msra.mxu0 0.0
    %180 = vmatprep.subr.mxu0 0.0
    %181 = vmatpush2.msra.mxu0 0.0
    %182 = vmatprep.subr.mxu0 0.0
    %183 = vmatpush2.msra.mxu0 0.0
    %184 = vmatprep.subr.mxu0 0.0
    %185 = vmatpush2.msra.mxu0 0.0
    %186 = vmatprep.subr.mxu0 0.0
    %187 = vmatpush2.msra.mxu0 0.0
    %188 = vmatprep.subr.mxu0 0.0
    %189 = vmatpush2.msra.mxu0 0.0
    %190 = vmatprep.subr.mxu0 0.0
    %191 = vmatpush2.msra.mxu0 0.0
    %192 = vmatprep.subr.mxu0 0.0
    %193 = vmatpush2.msra.mxu0 0.0
    %194 = vmatprep.subr.mxu0 0.0
    %195 = vmatpush2.msra.mxu0 0.0
    %196 = vmatprep.subr.mxu0 0.0
    %197 = vmatpush2.msra.mxu0 0.0
    %198 = vmatprep.subr.mxu0 0.0
    %199 = vmatpush2.msra.mxu0 0.0
    %200 = vmatprep.subr.mxu0 0.0
    %201 = vmatpush2.msra.mxu0 0.0
    %202 = vmatprep.subr.mxu0 0.0
    %203 = vmatpush2.msra.mxu0 0.0
    %204 = vmatprep.subr.mxu0 0.0
    %205 = vmatpush2.msra.mxu0 0.0
    %206 = vmatprep.subr.mxu0 0.0
    %207 = vmatpush2.msra.mxu0 0.0
    %208 = vmatprep.subr.mxu0 0.0
    %209 = vmatpush2.msra.mxu0 0.0
    %210 = vmatprep.mubr.f32.mxu0 0.0
    %211 = vmatmul.mubr.f32.gmra.mxu0 %v128
    %v212 = vpop.f32.mrf.mxu0
    %v213 = vadd.f32 0.0, %v212
    %v214 = vpop.f32.mrf.mxu0
    %215 = vmatprep.mubr.f32.mxu0 0.0
    %216 = vmatmul.mubr.f32.gmra.mxu0 %v129
    %v217 = vpop.f32.mrf.mxu0
    %v218 = vadd.f32 0.0, %v217
    %v219 = vpop.f32.mrf.mxu0
    %220 = vdwg.mxu0
    %221 = vmatprep.subr.mxu0 0.0
    %222 = vmatpush1.msra.mxu0 %v127
    %223 = vmatprep.subr.mxu0 0.0
    %224 = vmatpush1.msra.mxu0 %v126
    %225 = vmatprep.subr.mxu0 0.0
    %226 = vmatpush1.msra.mxu0 %v125
    %227 = vmatprep.subr.mxu0 0.0
    %228 = vmatpush1.msra.mxu0 %v124
    %229 = vmatprep.subr.mxu0 0.0
    %230 = vmatpush1.msra.mxu0 %v123
    %231 = vmatprep.subr.mxu0 0.0
    %232 = vmatpush1.msra.mxu0 %v122
    %233 = vmatprep.subr.mxu0 0.0
    %234 = vmatpush1.msra.mxu0 %v121
    %235 = vmatprep.subr.mxu0 0.0
    %236 = vmatpush1.msra.mxu0 %v120
    %237 = vmatprep.subr.mxu0 0.0
    %238 = vmatpush1.msra.mxu0 %v119
    %239 = vmatprep.subr.mxu0 0.0
    %240 = vmatpush1.msra.mxu0 %v118
    %241 = vmatprep.subr.mxu0 0.0
    %242 = vmatpush1.msra.mxu0 %v117
    %243 = vmatprep.subr.mxu0 0.0
    %244 = vmatpush1.msra.mxu0 %v116
    %245 = vmatprep.subr.mxu0 0.0
    %246 = vmatpush1.msra.mxu0 %v115
    %247 = vmatprep.subr.mxu0 0.0
    %248 = vmatpush1.msra.mxu0 %v114
    %249 = vmatprep.subr.mxu0 0.0
    %250 = vmatpush1.msra.mxu0 %v113
    %251 = vmatprep.subr.mxu0 0.0
    %252 = vmatpush1.msra.mxu0 %v112
    %253 = vmatprep.subr.mxu0 0.0
    %254 = vmatpush2.msra.mxu0 0.0
    %255 = vmatprep.subr.mxu0 0.0
    %256 = vmatpush2.msra.mxu0 0.0
    %257 = vmatprep.subr.mxu0 0.0
    %258 = vmatpush2.msra.mxu0 0.0
    %259 = vmatprep.subr.mxu0 0.0
    %260 = vmatpush2.msra.mxu0 0.0
    %261 = vmatprep.subr.mxu0 0.0
    %262 = vmatpush2.msra.mxu0 0.0
    %263 = vmatprep.subr.mxu0 0.0
    %264 = vmatpush2.msra.mxu0 0.0
    %265 = vmatprep.subr.mxu0 0.0
    %266 = vmatpush2.msra.mxu0 0.0
    %267 = vmatprep.subr.mxu0 0.0
    %268 = vmatpush2.msra.mxu0 0.0
    %269 = vmatprep.subr.mxu0 0.0
    %270 = vmatpush2.msra.mxu0 0.0
    %271 = vmatprep.subr.mxu0 0.0
    %272 = vmatpush2.msra.mxu0 0.0
    %273 = vmatprep.subr.mxu0 0.0
    %274 = vmatpush2.msra.mxu0 0.0
    %275 = vmatprep.subr.mxu0 0.0
    %276 = vmatpush2.msra.mxu0 0.0
    %277 = vmatprep.subr.mxu0 0.0
    %278 = vmatpush2.msra.mxu0 0.0
    %279 = vmatprep.subr.mxu0 0.0
    %280 = vmatpush2.msra.mxu0 0.0
    %281 = vmatprep.subr.mxu0 0.0
    %282 = vmatpush2.msra.mxu0 0.0
    %283 = vmatprep.subr.mxu0 0.0
    %284 = vmatpush2.msra.mxu0 0.0
    %285 = vmatprep.mubr.f32.mxu0 0.0
    %286 = vmatmul.mubr.f32.gmra.mxu0 %v110
    %v287 = vpop.f32.mrf.mxu0
    %v288 = vadd.f32 %v213, %v287
    %v289 = vpop.f32.mrf.mxu0
    %290 = vmatprep.mubr.f32.mxu0 0.0
    %291 = vmatmul.mubr.f32.gmra.mxu0 %v111
    %v292 = vpop.f32.mrf.mxu0
    %v293 = vadd.f32 %v218, %v292
    %v294 = vpop.f32.mrf.mxu0
    %295 = vdwg.mxu0
    %v296 = vld [vmem:[%s6] sm:$0x1]
    %v298 = vlaneseq
    %v299 = vshrl.u32 %v298, 7
    %v300 = vsub.s32 0, %v299
    %v301 = vrot.slane %v296, %v300
    %v303 = vadd.f32 %v288, %v301
    %v304 = vadd.f32 %v293, %v301
    %v305 = vld [vmem:[#allocation5] sm:$0xff]
    %v306 = vld [vmem:[#allocation5 + $0x8] sm:$0xff]
    %v307 = vld [vmem:[%s3] sm:$0xff]
    %v308 = vld [vmem:[%s3 + $0x8] sm:$0xff]
    %310 = vset.pattern.permute.xlu0 0
    %311 = vperm.xlu0 %310, %v307
    %v312 = vpop.permute.xlu0 %311
    %315 = vset.pattern.permute.xlu0 0
    %316 = vperm.xlu0 %315, %v308
    %v317 = vpop.permute.xlu0 %316
    %v319 = vmul.f32 %v312, %v303
    %v320 = vmul.f32 %v317, %v304
    %v321 = vadd.f32 %v305, %v319
    %v322 = vadd.f32 %v306, %v320
    %323 = vadd.xlane.f32.xlu0 %v321
    %v324 = vpop.xlane.xlu0 %323
    %325 = vadd.xlane.f32.xlu0 %v322
    %v326 = vpop.xlane.xlu0 %325
    %v327 = vrcp.pop 128.0
    %v328 = vmul.f32 %v324, %v327
    %v329 = vmul.f32 %v326, %v327
    %v330 = vsub.f32 %v321, %v328
    %v331 = vsub.f32 %v322, %v329
    %v332 = vmul.f32 %v330, %v330
    %v333 = vmul.f32 %v331, %v331
    %334 = vadd.xlane.f32.xlu0 %v332
    %v335 = vpop.xlane.xlu0 %334
    %336 = vadd.xlane.f32.xlu0 %v333
    %v337 = vpop.xlane.xlu0 %336
    %v338 = vmul.f32 %v335, %v327
    %v339 = vmul.f32 %v337, %v327
    %v340 = vadd.f32 %v338, 1e-05
    %v341 = vadd.f32 %v339, 1e-05
    %v342 = vrsqrt.pop %v340
    %v343 = vrsqrt.pop %v341
    %v344 = vmul.f32 %v330, %v342
    %v345 = vmul.f32 %v331, %v343
    %v346 = vld [vmem:[%s7] sm:$0x1]
    %v348 = vlaneseq
    %v349 = vshrl.u32 %v348, 7
    %v350 = vsub.s32 0, %v349
    %v351 = vrot.slane %v346, %v350
    %v353 = vmul.f32 %v344, %v351
    %v354 = vmul.f32 %v345, %v351
    %v355 = vld [vmem:[%s8] sm:$0x1]
    %v357 = vlaneseq
    %v358 = vshrl.u32 %v357, 7
    %v359 = vsub.s32 0, %v358
    %v360 = vrot.slane %v355, %v359
    %v362 = vadd.f32 %v353, %v360
    %v363 = vadd.f32 %v354, %v360
    %v364 = vld [vmem:[#allocation10] sm:$0xff]
    %v365 = vld [vmem:[#allocation10 + $0x8] sm:$0xff]
    %v366 = vld [vmem:[#allocation10 + $0x10] sm:$0xff]
    %v367 = vld [vmem:[#allocation10 + $0x18] sm:$0xff]
    %v368 = vld [vmem:[#allocation10 + $0x20] sm:$0xff]
    %v369 = vld [vmem:[#allocation10 + $0x28] sm:$0xff]
    %v370 = vld [vmem:[#allocation10 + $0x30] sm:$0xff]
    %v371 = vld [vmem:[#allocation10 + $0x38] sm:$0xff]
    %v372 = vld [vmem:[#allocation10 + $0x40] sm:$0xff]
    %v373 = vld [vmem:[#allocation10 + $0x48] sm:$0xff]
    %v374 = vld [vmem:[#allocation10 + $0x50] sm:$0xff]
    %v375 = vld [vmem:[#allocation10 + $0x58] sm:$0xff]
    %v376 = vld [vmem:[#allocation10 + $0x60] sm:$0xff]
    %v377 = vld [vmem:[#allocation10 + $0x68] sm:$0xff]
    %v378 = vld [vmem:[#allocation10 + $0x70] sm:$0xff]
    %v379 = vld [vmem:[#allocation10 + $0x78] sm:$0xff]
    %v380 = vld [vmem:[%s10] sm:$0x1]
    %v382 = vlaneseq
    %v383 = vshrl.u32 %v382, 7
    %v384 = vsub.s32 0, %v383
    %v385 = vrot.slane %v380, %v384
    %387 = vmatprep.subr.mxu0 0.0
    %388 = vmatpush1.msra.mxu0 %v379
    %389 = vmatprep.subr.mxu0 0.0
    %390 = vmatpush1.msra.mxu0 %v378
    %391 = vmatprep.subr.mxu0 0.0
    %392 = vmatpush1.msra.mxu0 %v377
    %393 = vmatprep.subr.mxu0 0.0
    %394 = vmatpush1.msra.mxu0 %v376
    %395 = vmatprep.subr.mxu0 0.0
    %396 = vmatpush1.msra.mxu0 %v375
    %397 = vmatprep.subr.mxu0 0.0
    %398 = vmatpush1.msra.mxu0 %v374
    %399 = vmatprep.subr.mxu0 0.0
    %400 = vmatpush1.msra.mxu0 %v373
    %401 = vmatprep.subr.mxu0 0.0
    %402 = vmatpush1.msra.mxu0 %v372
    %403 = vmatprep.subr.mxu0 0.0
    %404 = vmatpush1.msra.mxu0 %v371
    %405 = vmatprep.subr.mxu0 0.0
    %406 = vmatpush1.msra.mxu0 %v370
    %407 = vmatprep.subr.mxu0 0.0
    %408 = vmatpush1.msra.mxu0 %v369
    %409 = vmatprep.subr.mxu0 0.0
    %410 = vmatpush1.msra.mxu0 %v368
    %411 = vmatprep.subr.mxu0 0.0
    %412 = vmatpush1.msra.mxu0 %v367
    %413 = vmatprep.subr.mxu0 0.0
    %414 = vmatpush1.msra.mxu0 %v366
    %415 = vmatprep.subr.mxu0 0.0
    %416 = vmatpush1.msra.mxu0 %v365
    %417 = vmatprep.subr.mxu0 0.0
    %418 = vmatpush1.msra.mxu0 %v364
    %419 = vmatprep.subr.mxu0 0.0
    %420 = vmatpush2.msra.mxu0 0.0
    %421 = vmatprep.subr.mxu0 0.0
    %422 = vmatpush2.msra.mxu0 0.0
    %423 = vmatprep.subr.mxu0 0.0
    %424 = vmatpush2.msra.mxu0 0.0
    %425 = vmatprep.subr.mxu0 0.0
    %426 = vmatpush2.msra.mxu0 0.0
    %427 = vmatprep.subr.mxu0 0.0
    %428 = vmatpush2.msra.mxu0 0.0
    %429 = vmatprep.subr.mxu0 0.0
    %430 = vmatpush2.msra.mxu0 0.0
    %431 = vmatprep.subr.mxu0 0.0
    %432 = vmatpush2.msra.mxu0 0.0
    %433 = vmatprep.subr.mxu0 0.0
    %434 = vmatpush2.msra.mxu0 0.0
    %435 = vmatprep.subr.mxu0 0.0
    %436 = vmatpush2.msra.mxu0 0.0
    %437 = vmatprep.subr.mxu0 0.0
    %438 = vmatpush2.msra.mxu0 0.0
    %439 = vmatprep.subr.mxu0 0.0
    %440 = vmatpush2.msra.mxu0 0.0
    %441 = vmatprep.subr.mxu0 0.0
    %442 = vmatpush2.msra.mxu0 0.0
    %443 = vmatprep.subr.mxu0 0.0
    %444 = vmatpush2.msra.mxu0 0.0
    %445 = vmatprep.subr.mxu0 0.0
    %446 = vmatpush2.msra.mxu0 0.0
    %447 = vmatprep.subr.mxu0 0.0
    %448 = vmatpush2.msra.mxu0 0.0
    %449 = vmatprep.subr.mxu0 0.0
    %450 = vmatpush2.msra.mxu0 0.0
    %451 = vmatprep.mubr.f32.mxu0 0.0
    %452 = vmatmul.mubr.f32.gmra.mxu0 %v362
    %v453 = vpop.f32.mrf.mxu0
    %v454 = vadd.f32 %v385, %v453
    %v455 = vpop.f32.mrf.mxu0
    %456 = vmatprep.mubr.f32.mxu0 0.0
    %457 = vmatmul.mubr.f32.gmra.mxu0 %v363
    %v458 = vpop.f32.mrf.mxu0
    %v459 = vadd.f32 %v385, %v458
    %v460 = vpop.f32.mrf.mxu0
    %461 = vdwg.mxu0
    %462 = vst [vmem:[#allocation11] sm:$0xff] %v454
    %463 = vst [vmem:[#allocation11 + $0x8] sm:$0xff] %v459
    %464 = vst [vmem:[#allocation12] sm:$0xff] %v321
    %465 = vst [vmem:[#allocation12 + $0x8] sm:$0xff] %v322
    // Predicated region
    $region66: #{tpu_custom_call.1} parent=1 // pred_check
      _
    $region67: #{tpu_custom_call.1} parent=1 // pred_check_branch
      %467 = sbr.rel (0) target = $region69
    $region68: #{tpu_custom_call.1} parent=1 // pred_region
      %s469 = ssub.s32 256, 256
      %470 = vsyncadd [#allocation4], %s469
      %s471 = sshll.u32 [#allocation11], 4
      %s472 = int_to_ptr.vmem [resolvable:$true] %s471
      %477 = dma.vmem_to_hbm [thread:$0]  %s472, 256, %s11, [#allocation4], 128, 128, 8
    $region69: #{tpu_custom_call.1} parent=1 // pred_fallthru
      _
    // Predicated region
    $region70: #{tpu_custom_call.1} parent=1 // pred_check
      _
    $region71: #{tpu_custom_call.1} parent=1 // pred_check_branch
      %479 = sbr.rel (0) target = $region73
    $region72: #{tpu_custom_call.1} parent=1 // pred_region
      %s481 = ssub.s32 256, 256
      %482 = vsyncadd [#allocation13], %s481
      %s483 = sshll.u32 [#allocation12], 4
      %s484 = int_to_ptr.vmem [resolvable:$true] %s483
      %489 = dma.vmem_to_hbm [thread:$0]  %s484, 256, %s12, [#allocation13], 128, 128, 8
    $region73: #{tpu_custom_call.1} parent=1 // pred_fallthru
      _
    // Predicated region
    $region74: #{tpu_custom_call.1} parent=1 // pred_check
      _
    $region75: #{tpu_custom_call.1} parent=1 // pred_check_branch
      %491 = sbr.rel (0) target = $region77
    $region76: #{tpu_custom_call.1} parent=1 // pred_region
      %492 = dma.done [#allocation4], 256
    $region77: #{tpu_custom_call.1} parent=1 // pred_fallthru
      _
    // Predicated region
    $region78: #{tpu_custom_call.1} parent=1 // pred_check
      _
    $region79: #{tpu_custom_call.1} parent=1 // pred_check_branch
      %494 = sbr.rel (0) target = $region81
    $region80: #{tpu_custom_call.1} parent=1 // pred_region
      %495 = dma.done [#allocation13], 256
    $region81: #{tpu_custom_call.1} parent=1 // pred_fallthru
      _
    %496 = vsyncpa [#allocation3], 1
    %497 = vsyncpa [#allocation6], 1
    %498 = vsyncpa [#allocation9], 1
    %499 = vsyncpa [#allocation4], 1
    %500 = vsyncpa [#allocation13], 1

</llo_original>
